<compile_context>
chip_gen: v7x
topology: tpu7x:2x2x1
jax: 0.10.0
libtpu: 0.0.40
codegen_flags: <defaults>
</compile_context>

<pallas_src>
import functools

import jax
import jax.numpy as jnp
from jax import lax
from jax.experimental import pallas as pl
from jax.experimental.pallas import tpu as pltpu


_DEF_SLAB_BYTES = 2 << 20   # f32-slab budget for the chunked reduce/apply loops


# --------------------------------------------------------------------------
# In-kernel helpers (operate on a (1, rows, C) block).
# --------------------------------------------------------------------------

def _pow2_divisor(n):
    """Largest power of two dividing n (n > 0)."""
    return n & (-n)


def _sum_sq(x_ref, slab):
    """Per-channel sum of squares over the block's row axis -> (1,1,C) f32.

    Chunked over `slab` rows so no full-block f32 temporary is materialized
    (matters for bf16 inputs and for big single-pass blocks).
    """
    rows, c = x_ref.shape[1], x_ref.shape[2]
    if slab >= rows:
        xf = x_ref[...].astype(jnp.float32)
        return jnp.sum(xf * xf, axis=1, keepdims=True)

    hint = _pow2_divisor(slab)

    def body(i, acc):
        start = pl.multiple_of(i * slab, hint)
        xs = x_ref[:, pl.ds(start, slab), :].astype(jnp.float32)
        return acc + jnp.sum(xs * xs, axis=1, keepdims=True)

    return lax.fori_loop(0, rows // slab, body,
                         jnp.zeros((1, 1, c), jnp.float32))


def _apply_slab(xs, nx, g, b, compute_dtype, out_dtype):
    """gamma * (x * Nx) + beta + x on one slab; g/b already in compute_dtype."""
    xc = xs.astype(compute_dtype)
    return (g * (xc * nx.astype(compute_dtype)) + b + xc).astype(out_dtype)


def _apply_block(x_ref, o_ref, nx, g, b, slab, compute_dtype):
    """Chunked elementwise apply of the GRN transform over a (1, rows, C) block."""
    rows = x_ref.shape[1]
    if slab >= rows:
        o_ref[...] = _apply_slab(x_ref[...], nx, g, b, compute_dtype,
                                 o_ref.dtype)
        return

    hint = _pow2_divisor(slab)

    def body(i, carry):
        start = pl.multiple_of(i * slab, hint)
        sl = pl.ds(start, slab)
        o_ref[:, sl, :] = _apply_slab(x_ref[:, sl, :], nx, g, b,
                                      compute_dtype, o_ref.dtype)
        return carry

    lax.fori_loop(0, rows // slab, body, 0)


# --------------------------------------------------------------------------
# Kernels.
# --------------------------------------------------------------------------

def _grn_single_pass_kernel(x_ref, g_ref, b_ref, o_ref, *, slab, compute_dtype):
    # One grid step = one whole image, flattened to (1, HW, C). 1R + 1W HBM.
    ssq = _sum_sq(x_ref, slab)                              # (1,1,C) f32
    gx = jnp.sqrt(ssq)                                      # ||x||_2 over (H,W)
    nx = gx / (jnp.mean(gx, axis=-1, keepdims=True) + 1e-6)
    _apply_block(x_ref, o_ref, nx, g_ref[...], b_ref[...], slab, compute_dtype)


def _grn_reduce_kernel(x_ref, nx_ref, *, slab):
    # grid = (N, n_hw); accumulate ssq into the resident (1,1,C) output block,
    # convert it to Nx on the last HW tile of each image.
    h = pl.program_id(1)

    @pl.when(h == 0)
    def _init():
        nx_ref[...] = jnp.zeros_like(nx_ref)

    nx_ref[...] += _sum_sq(x_ref, slab)

    @pl.when(h == pl.num_programs(1) - 1)
    def _finalize():
        gx = jnp.sqrt(nx_ref[...])
        nx_ref[...] = gx / (jnp.mean(gx, axis=-1, keepdims=True) + 1e-6)


def _grn_apply_kernel(x_ref, nx_ref, g_ref, b_ref, o_ref, *, slab,
                      compute_dtype):
    # grid = (N, n_hw), fully parallel: every tile is independent.
    _apply_block(x_ref, o_ref, nx_ref[...], g_ref[...], b_ref[...],
                 slab, compute_dtype)


# --------------------------------------------------------------------------
# Wrapper-side sizing helpers.
# --------------------------------------------------------------------------

def _vmem_budget_bytes():
    """Generation-aware usable scoped-VMEM cap (leaves Mosaic headroom)."""
    cap = 0
    try:
        info = pltpu.get_tpu_info()
        cap = int(getattr(info, "vmem_capacity_bytes", 0) or 0)
    except Exception:          # no info available -> be conservative
        cap = 0
    if cap <= 0:
        cap = 64 << 20         # assume v7x-class (smallest per-core VMEM)
    if cap <= (64 << 20):      # v7x: 64 MiB physical per TensorCore
        limit = min(cap - (8 << 20), 56 << 20)
    else:                      # v5e / v6e: 128 MiB physical
        limit = min(cap - (16 << 20), 112 << 20)
    return max(limit, 16 << 20)


def _aligned_divisors(n, align):
    out = []
    cand = align
    while cand < n:
        if n % cand == 0:
            out.append(cand)
        cand += align
    return out


def _pick_hw_tile(hw, c, itemsize, max_tile_bytes, sublane):
    """Largest aligned proper divisor of hw whose tile fits max_tile_bytes.

    Falls back to the smallest aligned divisor (tile over budget beats a whole
    oversize image); returns 0 only if hw has no multiple-of-8 divisor at all.
    """
    best_fit, smallest = 0, 0
    for align in dict.fromkeys((sublane, 8)):
        for d in _aligned_divisors(hw, align):
            if d * c * itemsize <= max_tile_bytes:
                best_fit = max(best_fit, d)
            smallest = d if smallest == 0 else min(smallest, d)
    return best_fit if best_fit else smallest


def _pick_slab(rows, c, sublane, max_slab_bytes):
    """Largest aligned divisor of rows whose f32 slab fits max_slab_bytes."""
    if rows * c * 4 <= max_slab_bytes:
        return rows
    best = 0
    for align in dict.fromkeys((sublane, 8)):
        for d in _aligned_divisors(rows, align):
            if d * c * 4 <= max_slab_bytes:
                best = max(best, d)
    return best if best else rows


# --------------------------------------------------------------------------
# Public entry point.
# --------------------------------------------------------------------------

def grn(x, gamma, beta, *, max_block_bytes=None,
        max_slab_bytes=_DEF_SLAB_BYTES, fp32_apply=False):
    """GRN forward. x: (N, H, W, C); gamma/beta broadcastable to (C,).

    max_block_bytes: per-image byte cutoff for the single-pass path
        (None -> derived from this chip's VMEM capacity).
    fp32_apply: force the elementwise apply to f32 even for bf16 inputs
        (exact parity with an f32 reference; default keeps bf16 on the
        elementwise path, which matches PyTorch-in-bf16 behavior).
    """
    N, H, W, C = x.shape
    HW = H * W
    itemsize = jnp.dtype(x.dtype).itemsize
    sublane = 8 * max(1, 4 // itemsize)        # f32: 8, bf16: 16, int8: 32

    vmem_limit = _vmem_budget_bytes()
    # ~4.5x block (2 in-bufs + 2 out-bufs + slab temps) must fit the cap.
    auto_block = (vmem_limit - (8 << 20)) * 2 // 9
    if max_block_bytes is None:
        max_block_bytes = auto_block
    max_block_bytes = max(int(max_block_bytes), sublane * C * itemsize)

    compute_dtype = (jnp.bfloat16
                     if (x.dtype == jnp.bfloat16 and not fp32_apply)
                     else jnp.float32)

    x2 = x.reshape(N, HW, C)
    # Tiny grid-resident parameters, pre-cast once to the apply dtype.
    g = jnp.asarray(gamma, compute_dtype).reshape(1, 1, C)
    b = jnp.asarray(beta, compute_dtype).reshape(1, 1, C)

    block_bytes = HW * C * itemsize

    hw_tile = 0
    if block_bytes > max_block_bytes:
        # Target multi-MiB tiles (85%+ of HBM roofline) but never bigger than
        # the per-image budget.
        tile_budget = min(8 << 20, max_block_bytes)
        hw_tile = _pick_hw_tile(HW, C, itemsize, tile_budget, sublane)
        # hw_tile == 0 only when HW has no multiple-of-8 divisor (e.g. 7x7,
        # 14x14 stages) -- those images are small, fall through to single pass.
        # TODO(synk): 4-D (1, h_tile, W, C) tiling for huge images whose HW has
        # no multiple-of-8 divisor.

    def _clamp_vmem(need):
        return int(min(max(need, 16 << 20), vmem_limit))

    if hw_tile == 0:
        # ---------------- single pass: 1R + 1W ----------------
        # TODO(synk): split HW across both TensorCores for the batch-1 case.
        slab = _pick_slab(HW, C, sublane, max_slab_bytes)
        out2 = pl.pallas_call(
            functools.partial(_grn_single_pass_kernel, slab=slab,
                              compute_dtype=compute_dtype),
            out_shape=jax.ShapeDtypeStruct((N, HW, C), x.dtype),
            grid_spec=pltpu.PrefetchScalarGridSpec(
                num_scalar_prefetch=0,
                grid=(N,),
                in_specs=[
                    pl.BlockSpec((1, HW, C), lambda n: (n, 0, 0)),
                    pl.BlockSpec((1, 1, C), lambda n: (0, 0, 0)),
                    pl.BlockSpec((1, 1, C), lambda n: (0, 0, 0)),
                ],
                out_specs=pl.BlockSpec((1, HW, C), lambda n: (n, 0, 0)),
            ),
            compiler_params=pltpu.CompilerParams(
                dimension_semantics=("parallel",),
                vmem_limit_bytes=_clamp_vmem(
                    9 * block_bytes // 2 + 4 * slab * C * 4 + (4 << 20)),
            ),
            cost_estimate=pl.CostEstimate(
                flops=6 * N * HW * C,
                transcendentals=N * C,
                bytes_accessed=2 * N * HW * C * itemsize + 8 * C,
            ),
        )(x2, g, b)
    else:
        # ---------------- tiled two-pass: 2R + 1W ----------------
        n_hw = HW // hw_tile
        tile_bytes = hw_tile * C * itemsize
        slab = _pick_slab(hw_tile, C, sublane, max_slab_bytes)

        # Pass 1: per-image, per-channel Nx = Gx / (mean_C(Gx) + 1e-6).
        nx = pl.pallas_call(
            functools.partial(_grn_reduce_kernel, slab=slab),
            out_shape=jax.ShapeDtypeStruct((N, 1, C), jnp.float32),
            grid_spec=pltpu.PrefetchScalarGridSpec(
                num_scalar_prefetch=0,
                grid=(N, n_hw),
                in_specs=[pl.BlockSpec((1, hw_tile, C),
                                       lambda n, h: (n, h, 0))],
                out_specs=pl.BlockSpec((1, 1, C), lambda n, h: (n, 0, 0)),
            ),
            compiler_params=pltpu.CompilerParams(
                dimension_semantics=("parallel", "arbitrary"),
                vmem_limit_bytes=_clamp_vmem(
                    3 * tile_bytes + 4 * slab * C * 4 + (4 << 20)),
            ),
            cost_estimate=pl.CostEstimate(
                flops=2 * N * HW * C,
                transcendentals=N * C,
                bytes_accessed=N * HW * C * itemsize + 4 * N * C,
            ),
        )(x2)

        # Pass 2: elementwise apply, fully parallel over (N, HW tiles) so both
        # TensorCores stay busy even at batch 1.
        out2 = pl.pallas_call(
            functools.partial(_grn_apply_kernel, slab=slab,
                              compute_dtype=compute_dtype),
            out_shape=jax.ShapeDtypeStruct((N, HW, C), x.dtype),
            grid_spec=pltpu.PrefetchScalarGridSpec(
                num_scalar_prefetch=0,
                grid=(N, n_hw),
                in_specs=[
                    pl.BlockSpec((1, hw_tile, C), lambda n, h: (n, h, 0)),
                    pl.BlockSpec((1, 1, C), lambda n, h: (n, 0, 0)),
                    pl.BlockSpec((1, 1, C), lambda n, h: (0, 0, 0)),
                    pl.BlockSpec((1, 1, C), lambda n, h: (0, 0, 0)),
                ],
                out_specs=pl.BlockSpec((1, hw_tile, C),
                                       lambda n, h: (n, h, 0)),
            ),
            compiler_params=pltpu.CompilerParams(
                dimension_semantics=("parallel", "parallel"),
                vmem_limit_bytes=_clamp_vmem(
                    9 * tile_bytes // 2 + 4 * slab * C * 4 + (4 << 20)),
            ),
            cost_estimate=pl.CostEstimate(
                flops=4 * N * HW * C,
                transcendentals=0,
                bytes_accessed=2 * N * HW * C * itemsize + 4 * N * C + 8 * C,
            ),
        )(x2, nx, g, b)

    return out2.reshape(N, H, W, C)


def grn_ref(x, gamma, beta):
    """Pure-JAX reference mirroring the PyTorch forward exactly."""
    xf = x.astype(jnp.float32)
    gx = jnp.sqrt(jnp.sum(xf * xf, axis=(1, 2), keepdims=True))
    nx = gx / (jnp.mean(gx, axis=-1, keepdims=True) + 1e-6)
    g = jnp.asarray(gamma, jnp.float32).reshape(1, 1, 1, -1)
    b = jnp.asarray(beta, jnp.float32).reshape(1, 1, 1, -1)
    return (g * (xf * nx) + b + xf).astype(x.dtype)


if __name__ == "__main__":
    key = jax.random.PRNGKey(0)
    kx, kg, kb, kx2 = jax.random.split(key, 4)

    # C = 128: lane-dense channel axis (like real GRN dims 384/768/1536).
    N, H, W, C = 2, 8, 8, 128
    x = jax.random.normal(kx, (N, H, W, C), dtype=jnp.float32)
    gamma = 0.1 * jax.random.normal(kg, (1, 1, 1, C), dtype=jnp.float32)
    beta = 0.1 * jax.random.normal(kb, (1, 1, 1, C), dtype=jnp.float32)
    exp = grn_ref(x, gamma, beta)

    # 1) single-pass path (whole image per grid step).
    out = jax.block_until_ready(grn(x, gamma, beta))
    assert out.shape == x.shape and out.dtype == x.dtype
    assert jnp.allclose(out, exp, atol=1e-5, rtol=1e-5)

    # 1b) single-pass with the chunked slab loop forced (tiny slab budget).
    out1b = jax.block_until_ready(grn(x, gamma, beta, max_slab_bytes=16 * 1024))
    assert jnp.allclose(out1b, exp, atol=1e-5, rtol=1e-5)

    # 2) tiled two-pass path, chunked slabs also forced.
    N2, H2, W2 = 2, 16, 16
    x2 = jax.random.normal(kx2, (N2, H2, W2, C), dtype=jnp.float32)
    exp2 = grn_ref(x2, gamma, beta)
    out2 = jax.block_until_ready(
        grn(x2, gamma, beta, max_block_bytes=64 * 1024,
            max_slab_bytes=32 * 1024))
    assert out2.shape == x2.shape and out2.dtype == x2.dtype
    assert jnp.allclose(out2, exp2, atol=1e-5, rtol=1e-5)

    # 3) bf16 input: f32 reduction, bf16 elementwise apply path (single pass).
    xb = x.astype(jnp.bfloat16)
    expb = grn_ref(xb, gamma, beta)
    outb = jax.block_until_ready(grn(xb, gamma, beta))
    assert outb.dtype == jnp.bfloat16
    assert jnp.allclose(outb.astype(jnp.float32), expb.astype(jnp.float32),
                        atol=1e-1, rtol=1e-1)

    # 3b) bf16 with the f32 apply flag (tight parity with the f32 reference).
    outb32 = jax.block_until_ready(grn(xb, gamma, beta, fp32_apply=True))
    assert jnp.allclose(outb32.astype(jnp.float32), expb.astype(jnp.float32),
                        atol=5e-2, rtol=5e-2)

    # 3c) bf16 on the tiled two-pass path (16-row sublane alignment).
    xb2 = x2.astype(jnp.bfloat16)
    expb2 = grn_ref(xb2, gamma, beta)
    outb2 = jax.block_until_ready(
        grn(xb2, gamma, beta, max_block_bytes=32 * 1024))
    assert outb2.dtype == jnp.bfloat16
    assert jnp.allclose(outb2.astype(jnp.float32), expb2.astype(jnp.float32),
                        atol=1e-1, rtol=1e-1)

    print("KERNEL_OK")
</pallas_src>

<mosaic_0001>
module attributes {stable_mosaic.version = 11 : i64} {
  func.func @_grn_single_pass_kernel(%arg0: i32, %arg1: memref<1x64x128xf32, #tpu.memory_space<vmem>>, %arg2: memref<1x1x128xf32, #tpu.memory_space<vmem>>, %arg3: memref<1x1x128xf32, #tpu.memory_space<vmem>>, %arg4: memref<1x64x128xf32, #tpu.memory_space<vmem>>) attributes {dimension_semantics = [#tpu.dimension_semantics<parallel>], iteration_bounds = array<i64: 2>, scalar_prefetch = 0 : i64, scratch_operands = 0 : i64, tpu.core_type = #tpu.core_type<tc>, window_params = [{transform_indices = @transform_0, window_bounds = array<i64: 1, 64, 128>}, {pipeline_mode = #tpu.pipeline_mode<synchronous>, transform_indices = @transform_1, window_bounds = array<i64: 1, 1, 128>}, {pipeline_mode = #tpu.pipeline_mode<synchronous>, transform_indices = @transform_2, window_bounds = array<i64: 1, 1, 128>}, {transform_indices = @transform_3, window_bounds = array<i64: 1, 64, 128>}]} {
    %c0 = arith.constant 0 : index
    %c0_0 = arith.constant 0 : index
    %c0_1 = arith.constant 0 : index
    %0 = vector.load %arg1[%c0, %c0_0, %c0_1] : memref<1x64x128xf32, #tpu.memory_space<vmem>>, vector<1x64x128xf32>
    %1 = arith.mulf %0, %0 : vector<1x64x128xf32>
    %cst = arith.constant dense<0.000000e+00> : vector<1x128xf32>
    %2 = vector.multi_reduction <add>, %1, %cst [1] : vector<1x64x128xf32> to vector<1x128xf32>
    %3 = vector.shape_cast %2 : vector<1x128xf32> to vector<1x1x128xf32>
    %4 = math.sqrt %3 : vector<1x1x128xf32>
    %cst_2 = arith.constant dense<0.000000e+00> : vector<1x1xf32>
    %5 = vector.multi_reduction <add>, %4, %cst_2 [2] : vector<1x1x128xf32> to vector<1x1xf32>
    %6 = vector.shape_cast %5 : vector<1x1xf32> to vector<1x1x1xf32>
    %cst_3 = arith.constant 1.280000e+02 : f32
    %7 = vector.broadcast %cst_3 : f32 to vector<1x1x1xf32>
    %8 = arith.divf %6, %7 : vector<1x1x1xf32>
    %cst_4 = arith.constant 9.99999997E-7 : f32
    %9 = vector.broadcast %cst_4 : f32 to vector<1x1x1xf32>
    %10 = arith.addf %8, %9 : vector<1x1x1xf32>
    %11 = vector.broadcast %10 : vector<1x1x1xf32> to vector<1x1x128xf32>
    %12 = arith.divf %4, %11 : vector<1x1x128xf32>
    %c0_5 = arith.constant 0 : index
    %c0_6 = arith.constant 0 : index
    %c0_7 = arith.constant 0 : index
    %13 = vector.load %arg2[%c0_5, %c0_6, %c0_7] : memref<1x1x128xf32, #tpu.memory_space<vmem>>, vector<1x1x128xf32>
    %c0_8 = arith.constant 0 : index
    %c0_9 = arith.constant 0 : index
    %c0_10 = arith.constant 0 : index
    %14 = vector.load %arg3[%c0_8, %c0_9, %c0_10] : memref<1x1x128xf32, #tpu.memory_space<vmem>>, vector<1x1x128xf32>
    %c0_11 = arith.constant 0 : index
    %c0_12 = arith.constant 0 : index
    %c0_13 = arith.constant 0 : index
    %15 = vector.load %arg1[%c0_11, %c0_12, %c0_13] : memref<1x64x128xf32, #tpu.memory_space<vmem>>, vector<1x64x128xf32>
    %16 = vector.broadcast %12 : vector<1x1x128xf32> to vector<1x64x128xf32>
    %17 = arith.mulf %15, %16 : vector<1x64x128xf32>
    %18 = vector.broadcast %13 : vector<1x1x128xf32> to vector<1x64x128xf32>
    %19 = arith.mulf %18, %17 : vector<1x64x128xf32>
    %20 = vector.broadcast %14 : vector<1x1x128xf32> to vector<1x64x128xf32>
    %21 = arith.addf %19, %20 : vector<1x64x128xf32>
    %22 = arith.addf %21, %15 : vector<1x64x128xf32>
    %c0_14 = arith.constant 0 : index
    %c0_15 = arith.constant 0 : index
    %c0_16 = arith.constant 0 : index
    %23 = vector.load %arg4[%c0_14, %c0_15, %c0_16] : memref<1x64x128xf32, #tpu.memory_space<vmem>>, vector<1x64x128xf32>
    tpu.vector_store %arg4[%c0_14, %c0_15, %c0_16], %22 {strides = array<i32>} : memref<1x64x128xf32, #tpu.memory_space<vmem>>, vector<1x64x128xf32>,
    return
  }
  func.func @transform_0(%arg0: i32) -> (i32, i32, i32) {
    %c0_i32 = arith.constant 0 : i32
    %c0_i32_0 = arith.constant 0 : i32
    %c0_i32_1 = arith.constant 0 : i32
    return %arg0, %c0_i32, %c0_i32_0 : i32, i32, i32
  }
  func.func @transform_1(%arg0: i32) -> (i32, i32, i32) {
    %c0_i32 = arith.constant 0 : i32
    %c0_i32_0 = arith.constant 0 : i32
    %c0_i32_1 = arith.constant 0 : i32
    %c0_i32_2 = arith.constant 0 : i32
    return %c0_i32, %c0_i32_0, %c0_i32_1 : i32, i32, i32
  }
  func.func @transform_2(%arg0: i32) -> (i32, i32, i32) {
    %c0_i32 = arith.constant 0 : i32
    %c0_i32_0 = arith.constant 0 : i32
    %c0_i32_1 = arith.constant 0 : i32
    %c0_i32_2 = arith.constant 0 : i32
    return %c0_i32, %c0_i32_0, %c0_i32_1 : i32, i32, i32
  }
  func.func @transform_3(%arg0: i32) -> (i32, i32, i32) {
    %c0_i32 = arith.constant 0 : i32
    %c0_i32_0 = arith.constant 0 : i32
    %c0_i32_1 = arith.constant 0 : i32
    return %arg0, %c0_i32, %c0_i32_0 : i32, i32, i32
  }
}

</mosaic_0001>

<llo_original>
// kernel: tpu_custom_call.1
$region0: #{tpu_custom_call.1}
  #allocation0 [shape = 'u32[]', space=smem, size = 0x4, offset = 0x4, fixed_abs, tag = 'smem constant byte address 0x4 - core index']
  #allocation1 [shape = 'u32[144,128]{1,0:T(1,128)}', space=vmem, size = 0x12000, scoped, tag = 'internal scratch']
  %s0 = inlined_call_operand.hbm [shape: f32[2,64,128], index: 0, kind: input, shape index: {}]
  %s1 = inlined_call_operand.vmem [shape: f32[1,1,128], index: 1, kind: input, shape index: {}]
  %s2 = inlined_call_operand.vmem [shape: f32[1,1,128], index: 2, kind: input, shape index: {}]
  %s3 = inlined_call_operand.hbm [shape: f32[2,64,128], index: 3, kind: output, shape index: {}]
  %s4 = sld [smem:[#allocation0]]
  $region49: #{tpu_custom_call.1} parent=0
    _
  %s6 = ssub.s32 1, %s4
  %s7 = scalar_select 0, %s6, %s4
  $region1: #{tpu_custom_call.1} parent=0
    #allocation2 [shape = 'u8[65536]{0}', space=vmem, size = 0x10000, scoped, tag = 'input window, operand 0']
    #allocation3 [shape = 's32[2]{0}', space=sflag, size = 0x8, scoped, tag = 'scoped memory for tpu_custom_call.1']
    #allocation4 [shape = 's32[2]{0}', space=sflag, size = 0x8, scoped, tag = 'scoped memory for tpu_custom_call.1']
    #allocation5 [shape = 'u8[65536]{0}', space=vmem, size = 0x10000, scoped, tag = 'output window, operand 0']
    %8 = vsyncpa [#allocation3], 0
    %s9 = scalar_lea.sflag [#allocation3], 1
    %10 = vsyncpa %s9, 0
    %11 = vsyncpa [#allocation4], 0
    %s12 = scalar_lea.sflag [#allocation4], 1
    %13 = vsyncpa %s12, 0
    loop: start=0, step=1, limit=4
    $region2: #{tpu_custom_call.1} parent=1 // loop_pre_header
      _
    $region3: #{tpu_custom_call.1} parent=1 // loop_header
      %s15 = sphi 0, %s19
      %p16 = scmp.ge.s32.totalorder %s15, 4
      %s25 = sphi 0, %s27
      %s28 = sphi 0, %s25
      %s29 = sphi 0, %s28
      %s45 = sphi 0, %s29
      %s49 = sphi 0, %s49
      %s51 = sphi 0, %s49
      %s52 = sphi 0, %s51
      %s66 = sphi 0, %s52
      %s70 = sphi 0, %s70
      %s72 = sphi 0, %s70
      %s73 = sphi 0, %s72
      %s87 = sphi 0, %s73
      %s93 = sphi 0, %s95
      %s96 = sphi 0, %s93
      %s97 = sphi 0, %s96
      %s113 = sphi 0, %s97
    $region4: #{tpu_custom_call.1} parent=1 // loop_header_branch
      %18 = sbr.rel (%p16) target = $region8
    $region5: #{tpu_custom_call.1} parent=1 // loop_body
      %s20 = ssub.s32 %s15, 1
      %s21 = ssub.s32 %s15, 2
      %s22 = sadd.s32 %s15, 1
      %s23 = ssub.s32 %s15, %s22
      %p24 = scmp.eq.s32.totalorder %s23, 0
      %s26 = sadd.s32 %s25, 1
      %s27 = scalar_select %p24, %s25, %s26
      %p30 = pneg %p24
      %p31 = scmp.eq.s32.totalorder %s15, 1
      %p32 = por %p30, %p31
      %p33 = scmp.ne.s32.totalorder %s25, %s28
      %p34 = scmp.eq.s32.totalorder %s15, 0
      %p35 = por %p33, %p34
      %p36 = scmp.ne.s32.totalorder %s25, %s28
      %p37 = scmp.eq.s32.totalorder %s20, 1
      %p38 = por %p36, %p37
      %p39 = scmp.ne.s32.totalorder %s28, %s29
      %p40 = scmp.eq.s32.totalorder %s20, 0
      %p41 = por %p39, %p40
      %p42 = scmp.ne.s32.totalorder %s28, %s29
      %p43 = scmp.eq.s32.totalorder %s21, 1
      %p44 = por %p42, %p43
      %p46 = scmp.ne.s32.totalorder %s29, %s45
      %p47 = scmp.eq.s32.totalorder %s21, 0
      %p48 = por %p46, %p47
      %s50 = sadd.s32 %s49, 1
      %p53 = scmp.eq.s32.totalorder %s15, 1
      %p54 = scmp.ne.s32.totalorder %s49, %s51
      %p55 = scmp.eq.s32.totalorder %s15, 0
      %p56 = por %p54, %p55
      %p57 = scmp.ne.s32.totalorder %s49, %s51
      %p58 = scmp.eq.s32.totalorder %s20, 1
      %p59 = por %p57, %p58
      %p60 = scmp.ne.s32.totalorder %s51, %s52
      %p61 = scmp.eq.s32.totalorder %s20, 0
      %p62 = por %p60, %p61
      %p63 = scmp.ne.s32.totalorder %s51, %s52
      %p64 = scmp.eq.s32.totalorder %s21, 1
      %p65 = por %p63, %p64
      %p67 = scmp.ne.s32.totalorder %s52, %s66
      %p68 = scmp.eq.s32.totalorder %s21, 0
      %p69 = por %p67, %p68
      %s71 = sadd.s32 %s70, 1
      %p74 = scmp.eq.s32.totalorder %s15, 1
      %p75 = scmp.ne.s32.totalorder %s70, %s72
      %p76 = scmp.eq.s32.totalorder %s15, 0
      %p77 = por %p75, %p76
      %p78 = scmp.ne.s32.totalorder %s70, %s72
      %p79 = scmp.eq.s32.totalorder %s20, 1
      %p80 = por %p78, %p79
      %p81 = scmp.ne.s32.totalorder %s72, %s73
      %p82 = scmp.eq.s32.totalorder %s20, 0
      %p83 = por %p81, %p82
      %p84 = scmp.ne.s32.totalorder %s72, %s73
      %p85 = scmp.eq.s32.totalorder %s21, 1
      %p86 = por %p84, %p85
      %p88 = scmp.ne.s32.totalorder %s73, %s87
      %p89 = scmp.eq.s32.totalorder %s21, 0
      %p90 = por %p88, %p89
      %s91 = ssub.s32 %s15, %s22
      %p92 = scmp.eq.s32.totalorder %s91, 0
      %s94 = sadd.s32 %s93, 1
      %s95 = scalar_select %p92, %s93, %s94
      %p98 = pneg %p92
      %p99 = scmp.eq.s32.totalorder %s15, 1
      %p100 = por %p98, %p99
      %p101 = scmp.ne.s32.totalorder %s93, %s96
      %p102 = scmp.eq.s32.totalorder %s15, 0
      %p103 = por %p101, %p102
      %p104 = scmp.ne.s32.totalorder %s93, %s96
      %p105 = scmp.eq.s32.totalorder %s20, 1
      %p106 = por %p104, %p105
      %p107 = scmp.ne.s32.totalorder %s96, %s97
      %p108 = scmp.eq.s32.totalorder %s20, 0
      %p109 = por %p107, %p108
      %p110 = scmp.ne.s32.totalorder %s96, %s97
      %p111 = scmp.eq.s32.totalorder %s21, 1
      %p112 = por %p110, %p111
      %p114 = scmp.ne.s32.totalorder %s97, %s113
      %p115 = scmp.eq.s32.totalorder %s21, 0
      %p116 = por %p114, %p115
      %p117 = scmp.le.s32.totalorder 1, %s15
      %p118 = scmp.lt.s32.totalorder %s15, 3
      %p119 = pnand %p117, %p118
      %p120 = pneg %p119
      // Predicated region
      $region9: #{tpu_custom_call.1} parent=5 // pred_check
        _
      $region10: #{tpu_custom_call.1} parent=5 // pred_check_branch
        %122 = sbr.rel (%p119) target = $region12
      $region11: #{tpu_custom_call.1} parent=5 // pred_region
        %s123 = ssub.s32 %s15, 1
        // Predicated region
        $region13: #{tpu_custom_call.1} parent=11 // pred_check
          %p124 = pneg %p62
        $region14: #{tpu_custom_call.1} parent=11 // pred_check_branch
          %126 = sbr.rel (%p124) target = $region16
        $region15: #{tpu_custom_call.1} parent=11 // pred_region
          _
        $region16: #{tpu_custom_call.1} parent=11 // pred_fallthru
          _
        // Predicated region
        $region17: #{tpu_custom_call.1} parent=11 // pred_check
          %p127 = pneg %p83
        $region18: #{tpu_custom_call.1} parent=11 // pred_check_branch
          %129 = sbr.rel (%p127) target = $region20
        $region19: #{tpu_custom_call.1} parent=11 // pred_region
          _
        $region20: #{tpu_custom_call.1} parent=11 // pred_fallthru
          _
      $region12: #{tpu_custom_call.1} parent=5 // pred_fallthru
        _
      %p130 = scmp.lt.s32.totalorder %s15, 2
      // Predicated region
      $region21: #{tpu_custom_call.1} parent=5 // pred_check
        %p131 = pneg %p130
      $region22: #{tpu_custom_call.1} parent=5 // pred_check_branch
        %133 = sbr.rel (%p131) target = $region24
      $region23: #{tpu_custom_call.1} parent=5 // pred_region
        // Predicated region
        $region25: #{tpu_custom_call.1} parent=23 // pred_check
          %p134 = pneg %p35
        $region26: #{tpu_custom_call.1} parent=23 // pred_check_branch
          %136 = sbr.rel (%p134) target = $region28
        $region27: #{tpu_custom_call.1} parent=23 // pred_region
          %s137 = sand.u32 %s25, 1
          %s138 = scalar_lea.sflag [#allocation3], %s137
          %s139 = sand.u32 %s25, 1
          %s140 = smul.addr %s139, 64
          %s141 = scalar_lea.vmem [#allocation2], %s140
          %s143 = ssub.s32 1024, 1024
          %144 = vsyncadd %s138, %s143
          %s145 = smul.addr %s15, 8
          %s146 = smul.addr %s145, 128
          %s147 = scalar_lea.hbm %s0, %s146
          %s148 = sshll.u32 %s141, 4
          %s149 = int_to_ptr.vmem [resolvable:$true] %s148
          %154 = dma.hbm_to_vmem [thread:$0]  %s147, 1024, %s149, %s138, 128, 128, 8
        $region28: #{tpu_custom_call.1} parent=23 // pred_fallthru
          _
      $region24: #{tpu_custom_call.1} parent=5 // pred_fallthru
        _
      %p155 = scmp.le.s32.totalorder 1, %s15
      %p156 = scmp.lt.s32.totalorder %s15, 3
      %p157 = pnand %p155, %p156
      %p158 = pneg %p157
      // Predicated region
      $region29: #{tpu_custom_call.1} parent=5 // pred_check
        _
      $region30: #{tpu_custom_call.1} parent=5 // pred_check_branch
        %160 = sbr.rel (%p157) target = $region32
      $region31: #{tpu_custom_call.1} parent=5 // pred_region
        %s161 = ssub.s32 %s15, 1
        %s162 = sand.u32 %s28, 1
        %s163 = scalar_lea.sflag [#allocation3], %s162
        %s164 = sand.u32 %s28, 1
        %s165 = smul.addr %s164, 64
        %s166 = scalar_lea.vmem [#allocation2], %s165
        // Predicated region
        $region33: #{tpu_custom_call.1} parent=31 // pred_check
          %p167 = pneg %p41
        $region34: #{tpu_custom_call.1} parent=31 // pred_check_branch
          %169 = sbr.rel (%p167) target = $region36
        $region35: #{tpu_custom_call.1} parent=31 // pred_region
          %170 = dma.done %s163, 1024
        $region36: #{tpu_custom_call.1} parent=31 // pred_fallthru
          _
        %s171 = sand.u32 %s28, 1
        %s172 = scalar_lea.sflag [#allocation3], %s171
        %s173 = sand.u32 %s28, 1
        %s174 = smul.addr %s173, 64
        %s175 = scalar_lea.vmem [#allocation2], %s174
        %p176 = pneg %p41
        %p177 = pneg %p38
        %p178 = pneg %p62
        %p179 = pneg %p59
        %p180 = pneg %p83
        %p181 = pneg %p80
        %p182 = pneg %p109
        %p183 = pneg %p106
        %s184 = sand.u32 %s96, 1
        %s185 = scalar_lea.sflag [#allocation4], %s184
        %s186 = sand.u32 %s96, 1
        %s187 = smul.addr %s186, 64
        %s188 = scalar_lea.vmem [#allocation5], %s187
        %v189 = vld [vmem:[%s166] sm:$0xff]
        %v190 = vld [vmem:[%s166 + $0x8] sm:$0xff]
        %v191 = vld [vmem:[%s166 + $0x10] sm:$0xff]
        %v192 = vld [vmem:[%s166 + $0x18] sm:$0xff]
        %v193 = vld [vmem:[%s166 + $0x20] sm:$0xff]
        %v194 = vld [vmem:[%s166 + $0x28] sm:$0xff]
        %v195 = vld [vmem:[%s166 + $0x30] sm:$0xff]
        %v196 = vld [vmem:[%s166 + $0x38] sm:$0xff]
        %v197 = vmul.f32 %v189, %v189
        %v198 = vmul.f32 %v190, %v190
        %v199 = vmul.f32 %v191, %v191
        %v200 = vmul.f32 %v192, %v192
        %v201 = vmul.f32 %v193, %v193
        %v202 = vmul.f32 %v194, %v194
        %v203 = vmul.f32 %v195, %v195
        %v204 = vmul.f32 %v196, %v196
        %v205 = vadd.f32 %v197, %v198
        %v206 = vadd.f32 %v205, %v199
        %v207 = vadd.f32 %v206, %v200
        %v208 = vadd.f32 %v207, %v201
        %v209 = vadd.f32 %v208, %v202
        %v210 = vadd.f32 %v209, %v203
        %v211 = vadd.f32 %v210, %v204
        %v212 = vrot.slane %v211, 4
        %v213 = vadd.f32 %v211, %v212
        %v214 = vrot.slane %v213, 2
        %v215 = vadd.f32 %v213, %v214
        %v216 = vrot.slane %v215, 1
        %v217 = vadd.f32 %v215, %v216
        %v218 = vrsqrt.pop %v217
        %v219 = vmul.f32 %v217, %v218
        %vm220 = vcmp.eq.f32.partialorder %v217, inf
        %v221 = vsel %vm220, %v217, %v219
        %vm222 = vcmp.eq.f32.partialorder %v217, 0.0
        %v223 = vand.u32 %v217, 2147483648
        %v224 = vsel %vm222, %v223, %v221
        %225 = vadd.xlane.f32.xlu0 %v224
        %v226 = vpop.xlane.xlu0 %225
        %v227 = vrcp.pop 128.0
        %v228 = vmul.f32 %v226, %v227
        %v229 = vadd.f32 %v228, 1e-06
        %v230 = vrcp.pop %v229
        %v231 = vmul.f32 %v224, %v230
        %v232 = vld [vmem:[%s1] sm:$0x1]
        %v233 = vld [vmem:[%s2] sm:$0x1]
        %v234 = vmul.f32 %v189, %v231
        %v235 = vmul.f32 %v190, %v231
        %v236 = vmul.f32 %v191, %v231
        %v237 = vmul.f32 %v192, %v231
        %v238 = vmul.f32 %v193, %v231
        %v239 = vmul.f32 %v194, %v231
        %v240 = vmul.f32 %v195, %v231
        %v241 = vmul.f32 %v196, %v231
        %v243 = vlaneseq
        %v244 = vshrl.u32 %v243, 7
        %v245 = vsub.s32 0, %v244
        %v246 = vrot.slane %v232, %v245
        %v248 = vmul.f32 %v246, %v234
        %v249 = vmul.f32 %v246, %v235
        %v250 = vmul.f32 %v246, %v236
        %v251 = vmul.f32 %v246, %v237
        %v252 = vmul.f32 %v246, %v238
        %v253 = vmul.f32 %v246, %v239
        %v254 = vmul.f32 %v246, %v240
        %v255 = vmul.f32 %v246, %v241
        %v257 = vlaneseq
        %v258 = vshrl.u32 %v257, 7
        %v259 = vsub.s32 0, %v258
        %v260 = vrot.slane %v233, %v259
        %v262 = vadd.f32 %v248, %v260
        %v263 = vadd.f32 %v249, %v260
        %v264 = vadd.f32 %v250, %v260
        %v265 = vadd.f32 %v251, %v260
        %v266 = vadd.f32 %v252, %v260
        %v267 = vadd.f32 %v253, %v260
        %v268 = vadd.f32 %v254, %v260
        %v269 = vadd.f32 %v255, %v260
        %v270 = vadd.f32 %v262, %v189
        %v271 = vadd.f32 %v263, %v190
        %v272 = vadd.f32 %v264, %v191
        %v273 = vadd.f32 %v265, %v192
        %v274 = vadd.f32 %v266, %v193
        %v275 = vadd.f32 %v267, %v194
        %v276 = vadd.f32 %v268, %v195
        %v277 = vadd.f32 %v269, %v196
        %278 = vst [vmem:[%s188] sm:$0xff] %v270
        %279 = vst [vmem:[%s188 + $0x8] sm:$0xff] %v271
        %280 = vst [vmem:[%s188 + $0x10] sm:$0xff] %v272
        %281 = vst [vmem:[%s188 + $0x18] sm:$0xff] %v273
        %282 = vst [vmem:[%s188 + $0x20] sm:$0xff] %v274
        %283 = vst [vmem:[%s188 + $0x28] sm:$0xff] %v275
        %284 = vst [vmem:[%s188 + $0x30] sm:$0xff] %v276
        %285 = vst [vmem:[%s188 + $0x38] sm:$0xff] %v277
        %s286 = sand.u32 %s96, 1
        %s287 = scalar_lea.sflag [#allocation4], %s286
        %s288 = sand.u32 %s96, 1
        %s289 = smul.addr %s288, 64
        %s290 = scalar_lea.vmem [#allocation5], %s289
        // Predicated region
        $region37: #{tpu_custom_call.1} parent=31 // pred_check
          %p291 = pneg %p106
        $region38: #{tpu_custom_call.1} parent=31 // pred_check_branch
          %293 = sbr.rel (%p291) target = $region40
        $region39: #{tpu_custom_call.1} parent=31 // pred_region
          %s295 = ssub.s32 1024, 1024
          %296 = vsyncadd %s287, %s295
          %s297 = smul.addr %s20, 8
          %s298 = smul.addr %s297, 128
          %s299 = scalar_lea.hbm %s3, %s298
          %s300 = sshll.u32 %s290, 4
          %s301 = int_to_ptr.vmem [resolvable:$true] %s300
          %306 = dma.vmem_to_hbm [thread:$0]  %s301, 1024, %s299, %s287, 128, 128, 8
        $region40: #{tpu_custom_call.1} parent=31 // pred_fallthru
          _
      $region32: #{tpu_custom_call.1} parent=5 // pred_fallthru
        _
      %p307 = scmp.le.s32.totalorder 2, %s15
      // Predicated region
      $region41: #{tpu_custom_call.1} parent=5 // pred_check
        %p308 = pneg %p307
      $region42: #{tpu_custom_call.1} parent=5 // pred_check_branch
        %310 = sbr.rel (%p308) target = $region44
      $region43: #{tpu_custom_call.1} parent=5 // pred_region
        %s311 = ssub.s32 %s15, 2
        // Predicated region
        $region45: #{tpu_custom_call.1} parent=43 // pred_check
          %p312 = pneg %p112
        $region46: #{tpu_custom_call.1} parent=43 // pred_check_branch
          %314 = sbr.rel (%p312) target = $region48
        $region47: #{tpu_custom_call.1} parent=43 // pred_region
          %s315 = sand.u32 %s97, 1
          %s316 = scalar_lea.sflag [#allocation4], %s315
          %s317 = sand.u32 %s97, 1
          %s318 = smul.addr %s317, 64
          %s319 = scalar_lea.vmem [#allocation5], %s318
          %320 = dma.done %s316, 1024
        $region48: #{tpu_custom_call.1} parent=43 // pred_fallthru
          _
      $region44: #{tpu_custom_call.1} parent=5 // pred_fallthru
        _
    $region6: #{tpu_custom_call.1} parent=1 // loop_footer
      %s19 = sadd.s32 1, %s15
    $region7: #{tpu_custom_call.1} parent=1 // loop_footer_branch
      %14 = sbr.rel target = $region3
    $region8: #{tpu_custom_call.1} parent=1 // loop_exit
      _
    %321 = vsyncpa [#allocation3], 1
    %s322 = scalar_lea.sflag [#allocation3], 1
    %323 = vsyncpa %s322, 1
    %324 = vsyncpa [#allocation4], 1
    %s325 = scalar_lea.sflag [#allocation4], 1
    %326 = vsyncpa %s325, 1

</llo_original>
